<compile_context>
chip_gen: v6e
topology: v6e:2x2x1
jax: 0.10.0
libtpu: 0.0.40
codegen_flags: <defaults>
</compile_context>

<pallas_src>
import jax
import jax.numpy as jnp
from jax import lax
from jax.experimental import pallas as pl
from jax.experimental.pallas import tpu as pltpu


def _round_up(n, m):
    return ((n + m - 1) // m) * m


def _patch_embed_kernel(x_ref, w_ref, b_ref, o_ref):
    # x_ref: (tm, D_in)   w_ref: (tn, D_in)   b_ref: (1, tn)   o_ref: (tm, tn)
    # Contract x's last dim with weight's last dim (PyTorch layout) -> (tm, tn).
    acc = lax.dot_general(
        x_ref[...], w_ref[...],
        dimension_numbers=(((1,), (1,)), ((), ())),
        preferred_element_type=jnp.float32,
    )
    acc = acc + b_ref[...].astype(jnp.float32)
    o_ref[...] = acc.astype(o_ref.dtype)


def patch_embed(x, weight, bias, *, tm=256, tn=256, compute_dtype=None):
    """PatchEmbed forward: y = x @ weight.T + bias  (norm = Identity).

    x:      (B, L, D_in)
    weight: (D_out, D_in)   -- PyTorch nn.Linear convention
    bias:   (D_out,)
    compute_dtype: optional dtype (e.g. jnp.bfloat16) to cast x/weight for the
        MXU on v6e/v7x; accumulation stays f32. Default keeps input dtype.
    returns (B, L, D_out) in x.dtype
    """
    B, L, D_in = x.shape
    D_out = weight.shape[0]
    out_dtype = x.dtype
    M = B * L

    # ---- tile sizing / padding (no divisibility asserts) -------------------
    # Row tile: cap at the (16-rounded) row count; pad M up to a multiple.
    tm_eff = min(tm, _round_up(M, 16))
    M_pad = _round_up(M, tm_eff)

    # Lane tile: D_out padded to a multiple of 128; tn_eff = largest 128-multiple
    # <= tn that divides the padded width (falls back to 128).
    d_out_128 = _round_up(D_out, 128)
    tn_eff = 128
    for cand in range(min(_round_up(tn, 128), d_out_128), 127, -128):
        if d_out_128 % cand == 0:
            tn_eff = cand
            break
    D_out_pad = d_out_128

    # ---- build padded operands ---------------------------------------------
    x2 = x.reshape(M, D_in)
    if M_pad != M:
        x2 = jnp.pad(x2, ((0, M_pad - M), (0, 0)))
    w = weight
    b = bias
    if D_out_pad != D_out:
        w = jnp.pad(w, ((0, D_out_pad - D_out), (0, 0)))
        b = jnp.pad(b, ((0, D_out_pad - D_out),))
    if compute_dtype is not None:
        x2 = x2.astype(compute_dtype)
        w = w.astype(compute_dtype)
    b2 = b.reshape(1, D_out_pad).astype(jnp.float32)

    grid = (M_pad // tm_eff, D_out_pad // tn_eff)

    # ---- VMEM budget + cost estimate ----------------------------------------
    bpe_x = jnp.dtype(x2.dtype).itemsize
    bpe_w = jnp.dtype(w.dtype).itemsize
    bpe_o = jnp.dtype(out_dtype).itemsize
    tile_bytes = (tm_eff * D_in * bpe_x          # x row tile
                  + tn_eff * D_in * bpe_w        # weight column-block
                  + tn_eff * 4                   # bias block (f32)
                  + tm_eff * tn_eff * bpe_o)     # output tile
    vmem_limit = int(min(max(2 * tile_bytes + (4 << 20), 32 << 20), 100 << 20))

    cost = pl.CostEstimate(
        flops=2 * M_pad * D_in * D_out_pad,
        transcendentals=0,
        bytes_accessed=int(M_pad * D_in * bpe_x
                           + D_out_pad * D_in * bpe_w
                           + D_out_pad * 4
                           + M_pad * D_out_pad * bpe_o),
    )

    out = pl.pallas_call(
        _patch_embed_kernel,
        out_shape=jax.ShapeDtypeStruct((M_pad, D_out_pad), out_dtype),
        grid_spec=pltpu.PrefetchScalarGridSpec(
            num_scalar_prefetch=0,
            grid=grid,
            in_specs=[
                pl.BlockSpec((tm_eff, D_in), lambda i, j: (i, 0)),   # x row tile
                pl.BlockSpec((tn_eff, D_in), lambda i, j: (j, 0)),   # weight block (PyTorch layout)
                pl.BlockSpec((1, tn_eff), lambda i, j: (0, j)),      # bias block
            ],
            out_specs=pl.BlockSpec((tm_eff, tn_eff), lambda i, j: (i, j)),
        ),
        compiler_params=pltpu.CompilerParams(
            dimension_semantics=("parallel", "parallel"),
            vmem_limit_bytes=vmem_limit,
        ),
        cost_estimate=cost,
    )(x2, w, b2)

    return out[:M, :D_out].reshape(B, L, D_out)


if __name__ == "__main__":
    key = jax.random.PRNGKey(0)

    # --- small shapes consistent with the module's forward: (B, L, D_in) tokens.
    B, L, D_in, D_out = 2, 8, 32, 32
    kx, kw, kb, kx2, kw2, kb2 = jax.random.split(key, 6)

    x = jax.random.normal(kx, (B, L, D_in), dtype=jnp.float32)
    weight = jax.random.normal(kw, (D_out, D_in), dtype=jnp.float32) * (1.0 / D_in ** 0.5)
    bias = jax.random.normal(kb, (D_out,), dtype=jnp.float32) * 0.01

    y = jax.block_until_ready(patch_embed(x, weight, bias))
    y_ref = x @ weight.T + bias
    assert y.shape == (B, L, D_out)
    assert jnp.allclose(y, y_ref, atol=1e-5, rtol=1e-5)

    # --- ViT-like shape with non-tile-divisible token count (exercises padding).
    B2, L2, Din2, Dout2 = 2, 197, 384, 384
    x_b = jax.random.normal(kx2, (B2, L2, Din2), dtype=jnp.float32)
    w_b = jax.random.normal(kw2, (Dout2, Din2), dtype=jnp.float32) * (1.0 / Din2 ** 0.5)
    b_b = jax.random.normal(kb2, (Dout2,), dtype=jnp.float32) * 0.01

    y_b = jax.block_until_ready(patch_embed(x_b, w_b, b_b))
    y_b_ref = x_b @ w_b.T + b_b
    assert y_b.shape == (B2, L2, Dout2)
    assert jnp.allclose(y_b, y_b_ref, atol=1e-4, rtol=1e-4)

    print("KERNEL_OK")
</pallas_src>

<mosaic_0001>
module attributes {stable_mosaic.version = 11 : i64} {
  func.func @_patch_embed_kernel(%arg0: i32, %arg1: i32, %arg2: memref<16x32xf32, #tpu.memory_space<vmem>>, %arg3: memref<128x32xf32, #tpu.memory_space<vmem>>, %arg4: memref<1x128xf32, #tpu.memory_space<vmem>>, %arg5: memref<16x128xf32, #tpu.memory_space<vmem>>) attributes {dimension_semantics = [#tpu.dimension_semantics<parallel>, #tpu.dimension_semantics<parallel>], iteration_bounds = array<i64: 1, 1>, scalar_prefetch = 0 : i64, scratch_operands = 0 : i64, tpu.core_type = #tpu.core_type<tc>, window_params = [{transform_indices = @transform_0, window_bounds = array<i64: 16, 32>}, {transform_indices = @transform_1, window_bounds = array<i64: 128, 32>}, {transform_indices = @transform_2, window_bounds = array<i64: 1, 128>}, {transform_indices = @transform_3, window_bounds = array<i64: 16, 128>}]} {
    %c0 = arith.constant 0 : index
    %c0_0 = arith.constant 0 : index
    %0 = vector.load %arg2[%c0, %c0_0] : memref<16x32xf32, #tpu.memory_space<vmem>>, vector<16x32xf32>
    %c0_1 = arith.constant 0 : index
    %c0_2 = arith.constant 0 : index
    %1 = vector.load %arg3[%c0_1, %c0_2] : memref<128x32xf32, #tpu.memory_space<vmem>>, vector<128x32xf32>
    %cst = arith.constant dense<0.000000e+00> : vector<16x128xf32>
    %2 = tpu.matmul %0, %1, %cst {dimension_numbers = #tpu.dot_dimension_numbers<[1], [1], [0], [0], [0, 0, 1, 0], [], []>} : vector<16x32xf32>, vector<128x32xf32>, vector<16x128xf32> -> vector<16x128xf32>
    %c0_3 = arith.constant 0 : index
    %c0_4 = arith.constant 0 : index
    %3 = vector.load %arg4[%c0_3, %c0_4] : memref<1x128xf32, #tpu.memory_space<vmem>>, vector<1x128xf32>
    %4 = vector.broadcast %3 : vector<1x128xf32> to vector<16x128xf32>
    %5 = arith.addf %2, %4 : vector<16x128xf32>
    %c0_5 = arith.constant 0 : index
    %c0_6 = arith.constant 0 : index
    %6 = vector.load %arg5[%c0_5, %c0_6] : memref<16x128xf32, #tpu.memory_space<vmem>>, vector<16x128xf32>
    tpu.vector_store %arg5[%c0_5, %c0_6], %5 {strides = array<i32>} : memref<16x128xf32, #tpu.memory_space<vmem>>, vector<16x128xf32>,
    return
  }
  func.func @transform_0(%arg0: i32, %arg1: i32) -> (i32, i32) {
    %c0_i32 = arith.constant 0 : i32
    %c0_i32_0 = arith.constant 0 : i32
    return %arg0, %c0_i32 : i32, i32
  }
  func.func @transform_1(%arg0: i32, %arg1: i32) -> (i32, i32) {
    %c0_i32 = arith.constant 0 : i32
    %c0_i32_0 = arith.constant 0 : i32
    return %arg1, %c0_i32 : i32, i32
  }
  func.func @transform_2(%arg0: i32, %arg1: i32) -> (i32, i32) {
    %c0_i32 = arith.constant 0 : i32
    %c0_i32_0 = arith.constant 0 : i32
    return %c0_i32, %arg1 : i32, i32
  }
  func.func @transform_3(%arg0: i32, %arg1: i32) -> (i32, i32) {
    %c0_i32 = arith.constant 0 : i32
    return %arg0, %arg1 : i32, i32
  }
}

</mosaic_0001>

<llo_original>
// kernel: tpu_custom_call.1
$region0: #{tpu_custom_call.1}
  #allocation0 [shape = 'u32[]', space=smem, size = 0x4, offset = 0x4, fixed_abs, tag = 'smem constant byte address 0x4 - core index']
  #allocation1 [shape = 'u32[144,128]{1,0:T(1,128)}', space=vmem, size = 0x12000, scoped, tag = 'internal scratch']
  %s0 = inlined_call_operand.vmem [shape: f32[16,32], index: 0, kind: input, shape index: {}]
  %s1 = inlined_call_operand.vmem [shape: f32[128,32], index: 1, kind: input, shape index: {}]
  %s2 = inlined_call_operand.vmem [shape: f32[1,128], index: 2, kind: input, shape index: {}]
  %s3 = inlined_call_operand.hbm [shape: f32[16,128], index: 3, kind: output, shape index: {}]
  %s4 = sld [smem:[#allocation0]]
  $region22: #{tpu_custom_call.1} parent=0
    _
  %s6 = ssub.s32 1, %s4
  %s7 = scalar_select 0, %s6, %s4
  $region1: #{tpu_custom_call.1} parent=0
    #allocation2 [shape = 'u8[8192]{0}', space=vmem, size = 0x2000, scoped, tag = 'output window, operand 0, single buffered']
    #allocation3 [shape = 's32[1]{0}', space=sflag, size = 0x4, scoped, tag = 'scoped memory for tpu_custom_call.1']
    %8 = vsyncpa [#allocation3], 0
    // Predicated region
    $region2: #{tpu_custom_call.1} parent=1 // pred_check
      _
    $region3: #{tpu_custom_call.1} parent=1 // pred_check_branch
      %10 = sbr.rel (0) target = $region5
    $region4: #{tpu_custom_call.1} parent=1 // pred_region
      _
    $region5: #{tpu_custom_call.1} parent=1 // pred_fallthru
      _
    // Predicated region
    $region6: #{tpu_custom_call.1} parent=1 // pred_check
      _
    $region7: #{tpu_custom_call.1} parent=1 // pred_check_branch
      %12 = sbr.rel (0) target = $region9
    $region8: #{tpu_custom_call.1} parent=1 // pred_region
      _
    $region9: #{tpu_custom_call.1} parent=1 // pred_fallthru
      _
    // Predicated region
    $region10: #{tpu_custom_call.1} parent=1 // pred_check
      _
    $region11: #{tpu_custom_call.1} parent=1 // pred_check_branch
      %14 = sbr.rel (0) target = $region13
    $region12: #{tpu_custom_call.1} parent=1 // pred_region
      _
    $region13: #{tpu_custom_call.1} parent=1 // pred_fallthru
      _
    %v15 = vld [vmem:[%s0] sm:$0xff]
    %v16 = vld [vmem:[%s0 + $0x8] sm:$0xff]
    %v17 = vld [vmem:[%s1] sm:$0xff]
    %v18 = vld [vmem:[%s1 + $0x8] sm:$0xff]
    %v19 = vld [vmem:[%s1 + $0x10] sm:$0xff]
    %v20 = vld [vmem:[%s1 + $0x18] sm:$0xff]
    %v21 = vld [vmem:[%s1 + $0x20] sm:$0xff]
    %v22 = vld [vmem:[%s1 + $0x28] sm:$0xff]
    %v23 = vld [vmem:[%s1 + $0x30] sm:$0xff]
    %v24 = vld [vmem:[%s1 + $0x38] sm:$0xff]
    %v25 = vld [vmem:[%s1 + $0x40] sm:$0xff]
    %v26 = vld [vmem:[%s1 + $0x48] sm:$0xff]
    %v27 = vld [vmem:[%s1 + $0x50] sm:$0xff]
    %v28 = vld [vmem:[%s1 + $0x58] sm:$0xff]
    %v29 = vld [vmem:[%s1 + $0x60] sm:$0xff]
    %v30 = vld [vmem:[%s1 + $0x68] sm:$0xff]
    %v31 = vld [vmem:[%s1 + $0x70] sm:$0xff]
    %v32 = vld [vmem:[%s1 + $0x78] sm:$0xff]
    %v33 = vld [vmem:[%s2] sm:$0x1]
    %v35 = vlaneseq
    %v36 = vshrl.u32 %v35, 7
    %v37 = vsub.s32 0, %v36
    %v38 = vrot.slane %v33, %v37
    %vm40 = vcmask 261120
    %v42 = vsel %vm40, %v15, 0
    %v45 = vsel %vm40, %v16, 0
    %v48 = vsel %vm40, %v17, 0
    %v51 = vsel %vm40, %v18, 0
    %v54 = vsel %vm40, %v19, 0
    %v57 = vsel %vm40, %v20, 0
    %v60 = vsel %vm40, %v21, 0
    %v63 = vsel %vm40, %v22, 0
    %v66 = vsel %vm40, %v23, 0
    %v69 = vsel %vm40, %v24, 0
    %v72 = vsel %vm40, %v25, 0
    %v75 = vsel %vm40, %v26, 0
    %v78 = vsel %vm40, %v27, 0
    %v81 = vsel %vm40, %v28, 0
    %v84 = vsel %vm40, %v29, 0
    %v87 = vsel %vm40, %v30, 0
    %v90 = vsel %vm40, %v31, 0
    %v93 = vsel %vm40, %v32, 0
    %95 = vmatprep.subr.mxu0 0.0
    %96 = vmatpush1.xpose.msra.mxu0 %v93
    %97 = vmatprep.subr.mxu0 0.0
    %98 = vmatpush1.xpose.msra.mxu0 %v90
    %99 = vmatprep.subr.mxu0 0.0
    %100 = vmatpush1.xpose.msra.mxu0 %v87
    %101 = vmatprep.subr.mxu0 0.0
    %102 = vmatpush1.xpose.msra.mxu0 %v84
    %103 = vmatprep.subr.mxu0 0.0
    %104 = vmatpush1.xpose.msra.mxu0 %v81
    %105 = vmatprep.subr.mxu0 0.0
    %106 = vmatpush1.xpose.msra.mxu0 %v78
    %107 = vmatprep.subr.mxu0 0.0
    %108 = vmatpush1.xpose.msra.mxu0 %v75
    %109 = vmatprep.subr.mxu0 0.0
    %110 = vmatpush1.xpose.msra.mxu0 %v72
    %111 = vmatprep.subr.mxu0 0.0
    %112 = vmatpush1.xpose.msra.mxu0 %v69
    %113 = vmatprep.subr.mxu0 0.0
    %114 = vmatpush1.xpose.msra.mxu0 %v66
    %115 = vmatprep.subr.mxu0 0.0
    %116 = vmatpush1.xpose.msra.mxu0 %v63
    %117 = vmatprep.subr.mxu0 0.0
    %118 = vmatpush1.xpose.msra.mxu0 %v60
    %119 = vmatprep.subr.mxu0 0.0
    %120 = vmatpush1.xpose.msra.mxu0 %v57
    %121 = vmatprep.subr.mxu0 0.0
    %122 = vmatpush1.xpose.msra.mxu0 %v54
    %123 = vmatprep.subr.mxu0 0.0
    %124 = vmatpush1.xpose.msra.mxu0 %v51
    %125 = vmatprep.subr.mxu0 0.0
    %126 = vmatpush1.xpose.msra.mxu0 %v48
    %127 = vmatprep.subr.mxu0 0.0
    %128 = vmatpush2.xpose.msra.mxu0 0.0
    %129 = vmatprep.subr.mxu0 0.0
    %130 = vmatpush2.xpose.msra.mxu0 0.0
    %131 = vmatprep.subr.mxu0 0.0
    %132 = vmatpush2.xpose.msra.mxu0 0.0
    %133 = vmatprep.subr.mxu0 0.0
    %134 = vmatpush2.xpose.msra.mxu0 0.0
    %135 = vmatprep.subr.mxu0 0.0
    %136 = vmatpush2.xpose.msra.mxu0 0.0
    %137 = vmatprep.subr.mxu0 0.0
    %138 = vmatpush2.xpose.msra.mxu0 0.0
    %139 = vmatprep.subr.mxu0 0.0
    %140 = vmatpush2.xpose.msra.mxu0 0.0
    %141 = vmatprep.subr.mxu0 0.0
    %142 = vmatpush2.xpose.msra.mxu0 0.0
    %143 = vmatprep.subr.mxu0 0.0
    %144 = vmatpush2.xpose.msra.mxu0 0.0
    %145 = vmatprep.subr.mxu0 0.0
    %146 = vmatpush2.xpose.msra.mxu0 0.0
    %147 = vmatprep.subr.mxu0 0.0
    %148 = vmatpush2.xpose.msra.mxu0 0.0
    %149 = vmatprep.subr.mxu0 0.0
    %150 = vmatpush2.xpose.msra.mxu0 0.0
    %151 = vmatprep.subr.mxu0 0.0
    %152 = vmatpush2.xpose.msra.mxu0 0.0
    %153 = vmatprep.subr.mxu0 0.0
    %154 = vmatpush2.xpose.msra.mxu0 0.0
    %155 = vmatprep.subr.mxu0 0.0
    %156 = vmatpush2.xpose.msra.mxu0 0.0
    %157 = vmatprep.subr.mxu0 0.0
    %158 = vmatpush2.xpose.msra.mxu0 0.0
    %159 = vmatprep.mubr.f32.mxu0 0.0
    %160 = vmatmul.mubr.f32.gmra.mxu0 %v42
    %v161 = vpop.f32.mrf.mxu0
    %v162 = vadd.f32 %v38, %v161
    %v163 = vpop.f32.mrf.mxu0
    %164 = vmatprep.mubr.f32.mxu0 0.0
    %165 = vmatmul.mubr.f32.gmra.mxu0 %v45
    %v166 = vpop.f32.mrf.mxu0
    %v167 = vadd.f32 %v38, %v166
    %v168 = vpop.f32.mrf.mxu0
    %169 = vdwg.mxu0
    %170 = vst [vmem:[#allocation2] sm:$0xff] %v162
    %171 = vst [vmem:[#allocation2 + $0x8] sm:$0xff] %v167
    // Predicated region
    $region14: #{tpu_custom_call.1} parent=1 // pred_check
      _
    $region15: #{tpu_custom_call.1} parent=1 // pred_check_branch
      %173 = sbr.rel (0) target = $region17
    $region16: #{tpu_custom_call.1} parent=1 // pred_region
      %s175 = ssub.s32 256, 256
      %176 = vsyncadd [#allocation3], %s175
      %s177 = sshll.u32 [#allocation2], 4
      %s178 = int_to_ptr.vmem [resolvable:$true] %s177
      %183 = dma.vmem_to_hbm [thread:$0]  %s178, 256, %s3, [#allocation3], 128, 128, 8
    $region17: #{tpu_custom_call.1} parent=1 // pred_fallthru
      _
    // Predicated region
    $region18: #{tpu_custom_call.1} parent=1 // pred_check
      _
    $region19: #{tpu_custom_call.1} parent=1 // pred_check_branch
      %185 = sbr.rel (0) target = $region21
    $region20: #{tpu_custom_call.1} parent=1 // pred_region
      %186 = dma.done [#allocation3], 256
    $region21: #{tpu_custom_call.1} parent=1 // pred_fallthru
      _
    %187 = vsyncpa [#allocation3], 1

</llo_original>
